<compile_context>
chip_gen: v7x
topology: tpu7x:2x2x1
jax: 0.10.0
libtpu: 0.0.40
codegen_flags: <defaults>
</compile_context>

<pallas_src>
import math
import jax
import jax.numpy as jnp
from jax.experimental import pallas as pl
from jax.experimental.pallas import tpu as pltpu

# ----------------------------- configuration ------------------------------ #
B, C, H, W = 8, 4, 16, 16          # small NCHW input (B=8 -> f32 sublane tile)
NUM_CLASSES = 16
NC_PAD = 128                       # lane-dense padded class dimension
PATCH_LEN = 4                      # args.patch_len
DEYO_MARGIN = 0.5 * math.log(1000)     # entropy filtering margin
MARGIN_E0 = 0.4 * math.log(1000)       # entropy reweighting margin
PLPD_THRESHOLD = 0.3                   # resnet-style default
D = C * H * W


# --------------------- fused kernel: model + DeYO stats -------------------- #
def _ptta_kernel(x_ref, xp_ref, w_ref, b_ref, out_ref):
    bsz = x_ref.shape[0]
    nc_pad = w_ref.shape[1]

    # Single stacked MXU pass over (2B, D): rows [0,B) original images,
    # rows [B,2B) patch-shuffled.  The f32 concat lands on a sublane-tile
    # boundary; operands are bf16 with f32 accumulation and f32 bias.
    # Padded weight/bias lanes are exactly zero -> padded logit lanes are 0.
    x_both = jnp.concatenate([x_ref[...], xp_ref[...]], axis=0)
    logits_all = (
        jnp.dot(x_both.astype(jnp.bfloat16), w_ref[...],
                preferred_element_type=jnp.float32)
        + b_ref[...]
    )
    logits = logits_all[:bsz, :]       # original logits  (B, NC_PAD)
    logits_p = logits_all[bsz:, :]     # shuffled logits  (B, NC_PAD)

    col = jax.lax.broadcasted_iota(jnp.int32, (bsz, nc_pad), 1)
    valid = col < NUM_CLASSES
    neg_big = jnp.float32(-1e30)

    # softmax_entropy(outputs) = log(s) - sum(ez*z)/s over valid lanes.
    # The -1e30 pre-mask keeps padded lanes out of the row max; their exp
    # underflows to exactly 0, so no post-exp mask is needed.
    lm = jnp.where(valid, logits, neg_big)
    m = jnp.max(lm, axis=1, keepdims=True)
    z = lm - m                          # max over valid lanes is exactly 0
    ez = jnp.exp(z)
    s = jnp.sum(ez, axis=1, keepdims=True)
    sz = jnp.sum(ez * z, axis=1, keepdims=True)
    inv_s = 1.0 / s                     # exact divide: feeds thresholds
    ent = jnp.log(s) - sz * inv_s       # entropy per sample, (B, 1)

    # shuffled-branch softmax numerator / denominator (full probs never built)
    lpm = jnp.where(valid, logits_p, neg_big)
    mp = jnp.max(lpm, axis=1, keepdims=True)
    ezp = jnp.exp(lpm - mp)
    sp = jnp.sum(ezp, axis=1, keepdims=True)

    # pseudo-label cls1 = argmax over classes; computed on the masked logits
    # (softmax is monotone so it equals argmax(probs)).  First max, as torch.
    cls1 = jnp.min(jnp.where(lm >= m, col, nc_pad), axis=1, keepdims=True)
    # gather(probs, cls1) == exp(0)/s == 1/s ; gather(probs_prime, cls1):
    ezp_at = jnp.sum(jnp.where(col == cls1, ezp, 0.0), axis=1, keepdims=True)
    plpd = inv_s - ezp_at / sp          # (B, 1), exact divides

    # filtering (boolean indexing in torch -> masks; selected subset and the
    # resulting mean loss are identical)
    ent_mask = (ent < DEYO_MARGIN).astype(jnp.float32)        # args.filter_ent
    fmask = ent_mask * (plpd > PLPD_THRESHOLD).astype(jnp.float32)

    # reweighting: coeff = 1/exp(ent - margin_e0) + 1/exp(-plpd)
    #            =   exp(margin_e0 - ent)   +   exp(plpd)      (EUP only)
    coeff = jnp.exp(MARGIN_E0 - ent) + jnp.exp(plpd)

    backward = jnp.sum(ent_mask)
    final_backward = jnp.sum(fmask)
    total = jnp.sum(ent * coeff * fmask)
    # torch skips loss.backward() when no sample survives both filters; report
    # loss = 0.0 for that case (documented divergence from an empty mean).
    loss = jnp.where(final_backward > 0.0,
                     total / jnp.maximum(final_backward, 1.0),
                     0.0)

    # lane-dense stats slab:
    #   col 0 = entropys, col 1 = plpd, col 2 = loss,
    #   col 3 = backward, col 4 = final_backward, rest = 0.
    stats = jnp.where(col == 0, ent, 0.0)
    stats = jnp.where(col == 1, plpd, stats)
    stats = jnp.where(col == 2, loss, stats)
    stats = jnp.where(col == 3, backward, stats)
    stats = jnp.where(col == 4, final_backward, stats)

    # Single packed output: rows [0,B) logits, rows [B,2B) stats.  Both stores
    # are full (8,128) f32 tiles at sublane-tile boundaries (unmasked vst).
    out_ref[0:bsz, :] = logits
    out_ref[bsz:2 * bsz, :] = stats


def ptta_fused(x_flat, x_prime_flat, w_pad, b_pad):
    bsz = x_flat.shape[0]
    nc_pad = w_pad.shape[1]
    vmem_spec = pl.BlockSpec(memory_space=pltpu.MemorySpace.VMEM)
    return pl.pallas_call(
        _ptta_kernel,
        out_shape=jax.ShapeDtypeStruct((2 * bsz, nc_pad), jnp.float32),
        in_specs=[vmem_spec, vmem_spec, vmem_spec, vmem_spec],
        out_specs=vmem_spec,
    )(x_flat, x_prime_flat, w_pad, b_pad)


# ---------------------- glue: patch-shuffle augmentation ------------------- #
def patch_shuffle(x, key, patch_len=PATCH_LEN):
    # args.aug_type == 'patch'.  H, W are multiples of patch_len so the
    # resize_t / resize_o calls in the reference are identities.
    b, c, h, w = x.shape
    ph, pw = h // patch_len, w // patch_len
    # 'b c (ps1 h) (ps2 w) -> b (ps1 ps2) c h w'
    xp = x.reshape(b, c, patch_len, ph, patch_len, pw)
    xp = xp.transpose(0, 2, 4, 1, 3, 5).reshape(b, patch_len * patch_len, c, ph, pw)
    # per-sample random permutation of the patches (argsort of uniform noise)
    perm = jnp.argsort(
        jax.random.uniform(key, (b, patch_len * patch_len)), axis=-1
    )
    xp = xp[jnp.arange(b)[:, None], perm]
    # 'b (ps1 ps2) c h w -> b c (ps1 h) (ps2 w)'
    xp = xp.reshape(b, patch_len, patch_len, c, ph, pw)
    xp = xp.transpose(0, 3, 1, 4, 2, 5).reshape(b, c, h, w)
    return xp


# ------------------------------ PTTA forward ------------------------------- #
@jax.jit
def ptta_forward(x, w_pad, b_pad, key):
    """Returns (outputs, loss, [backward, final_backward], entropys, plpd).

    Mirrors PTTA.forward / forward_and_adapt_deyo: the PyTorch module returns
    `outputs` (original-model logits); the adaptation loss is the side
    computation that would drive the (skipped) optimizer step.  w_pad / b_pad
    are the pre-padded (hoisted) model parameters.
    """
    bsz = x.shape[0]
    x_flat = x.reshape(bsz, -1)
    x_prime_flat = patch_shuffle(x, key).reshape(bsz, -1)   # patch augmentation

    packed = ptta_fused(x_flat, x_prime_flat, w_pad, b_pad)  # (2B, 128)
    logits_pad, stats = packed[:bsz], packed[bsz:]

    outputs = logits_pad[:, :NUM_CLASSES]                    # self.model(x)
    ent = stats[:, 0:1]
    plpd = stats[:, 1:2]
    loss = stats[0, 2]
    counts = stats[0, 3:5]                       # [backward, final_backward]
    return outputs, loss, counts, ent, plpd


# ---------------------------------- main ----------------------------------- #
if __name__ == "__main__":
    key = jax.random.PRNGKey(0)
    kx, kw, kb, kp = jax.random.split(key, 4)

    # deterministic inputs & synthetic "model" parameters
    x = jax.random.normal(kx, (B, C, H, W), dtype=jnp.float32)
    w = jax.random.normal(kw, (D, NUM_CLASSES), dtype=jnp.float32) * 0.02
    b = jax.random.normal(kb, (1, NUM_CLASSES), dtype=jnp.float32) * 0.01

    # Hoisted once at init (perf review item 1): lane-pad classes to 128 and
    # cast the weight to bf16; never re-materialized per forward step.
    w_pad = jnp.zeros((D, NC_PAD), jnp.bfloat16).at[:, :NUM_CLASSES].set(
        w.astype(jnp.bfloat16))
    b_pad = jnp.zeros((1, NC_PAD), jnp.float32).at[:, :NUM_CLASSES].set(b)

    outputs, loss, counts, ent, plpd = ptta_forward(x, w_pad, b_pad, kp)
    jax.block_until_ready((outputs, loss, counts, ent, plpd))

    assert outputs.shape == (B, NUM_CLASSES)
    assert ent.shape == (B, 1) and plpd.shape == (B, 1)
    assert counts.shape == (2,)
    assert bool(jnp.isfinite(loss))
    print("KERNEL_OK")
</pallas_src>

<mosaic_0001>
module attributes {stable_mosaic.version = 11 : i64} {
  func.func @_ptta_kernel(%arg0: memref<8x1024xf32, #tpu.memory_space<vmem>>, %arg1: memref<8x1024xf32, #tpu.memory_space<vmem>>, %arg2: memref<1024x128xbf16, #tpu.memory_space<vmem>>, %arg3: memref<1x128xf32, #tpu.memory_space<vmem>>, %arg4: memref<16x128xf32, #tpu.memory_space<vmem>>) attributes {dimension_semantics = [], scalar_prefetch = 0 : i64, scratch_operands = 0 : i64, tpu.core_type = #tpu.core_type<tc>} {
    %c0 = arith.constant 0 : index
    %c0_0 = arith.constant 0 : index
    %0 = vector.load %arg0[%c0, %c0_0] : memref<8x1024xf32, #tpu.memory_space<vmem>>, vector<8x1024xf32>
    %c0_1 = arith.constant 0 : index
    %c0_2 = arith.constant 0 : index
    %1 = vector.load %arg1[%c0_1, %c0_2] : memref<8x1024xf32, #tpu.memory_space<vmem>>, vector<8x1024xf32>
    %2 = tpu.concatenate %0, %1 in 0 : vector<8x1024xf32>, vector<8x1024xf32> -> vector<16x1024xf32>
    %3 = arith.truncf %2 : vector<16x1024xf32> to vector<16x1024xbf16>
    %c0_3 = arith.constant 0 : index
    %c0_4 = arith.constant 0 : index
    %4 = vector.load %arg2[%c0_3, %c0_4] : memref<1024x128xbf16, #tpu.memory_space<vmem>>, vector<1024x128xbf16>
    %cst = arith.constant dense<0.000000e+00> : vector<16x128xf32>
    %5 = tpu.matmul %3, %4, %cst {dimension_numbers = #tpu.dot_dimension_numbers<[1], [0], [0], [1], [0, 0, 1, 1], [], []>} : vector<16x1024xbf16>, vector<1024x128xbf16>, vector<16x128xf32> -> vector<16x128xf32>
    %c0_5 = arith.constant 0 : index
    %c0_6 = arith.constant 0 : index
    %6 = vector.load %arg3[%c0_5, %c0_6] : memref<1x128xf32, #tpu.memory_space<vmem>>, vector<1x128xf32>
    %7 = vector.broadcast %6 : vector<1x128xf32> to vector<16x128xf32>
    %8 = arith.addf %5, %7 : vector<16x128xf32>
    %9 = vector.extract_strided_slice %8 {offsets = [0, 0], sizes = [8, 128], strides = [1, 1]} : vector<16x128xf32> to vector<8x128xf32>
    %10 = vector.extract_strided_slice %8 {offsets = [8, 0], sizes = [8, 128], strides = [1, 1]} : vector<16x128xf32> to vector<8x128xf32>
    %11 = tpu.iota {dimensions = array<i32: 1>} : vector<8x128xi32>
    %c16_i32 = arith.constant 16 : i32
    %12 = vector.broadcast %c16_i32 : i32 to vector<8x128xi32>
    %13 = arith.cmpi slt, %11, %12 : vector<8x128xi32>
    %cst_7 = arith.constant -1.000000e+30 : f32
    %14 = vector.broadcast %cst_7 : f32 to vector<8x128xf32>
    %15 = arith.select %13, %9, %14 : vector<8x128xi1>, vector<8x128xf32>
    %cst_8 = arith.constant dense<0xFF800000> : vector<8xf32>
    %16 = vector.multi_reduction <maximumf>, %15, %cst_8 [1] : vector<8x128xf32> to vector<8xf32>
    %17 = vector.shape_cast %16 : vector<8xf32> to vector<8x1xf32>
    %18 = vector.broadcast %17 : vector<8x1xf32> to vector<8x128xf32>
    %19 = arith.subf %15, %18 : vector<8x128xf32>
    %20 = math.exp %19 : vector<8x128xf32>
    %cst_9 = arith.constant dense<0.000000e+00> : vector<8xf32>
    %21 = vector.multi_reduction <add>, %20, %cst_9 [1] : vector<8x128xf32> to vector<8xf32>
    %22 = vector.shape_cast %21 : vector<8xf32> to vector<8x1xf32>
    %23 = arith.mulf %20, %19 : vector<8x128xf32>
    %cst_10 = arith.constant dense<0.000000e+00> : vector<8xf32>
    %24 = vector.multi_reduction <add>, %23, %cst_10 [1] : vector<8x128xf32> to vector<8xf32>
    %25 = vector.shape_cast %24 : vector<8xf32> to vector<8x1xf32>
    %cst_11 = arith.constant 1.000000e+00 : f32
    %26 = vector.broadcast %cst_11 : f32 to vector<8x1xf32>
    %27 = arith.divf %26, %22 : vector<8x1xf32>
    %28 = math.log %22 : vector<8x1xf32>
    %29 = arith.mulf %25, %27 : vector<8x1xf32>
    %30 = arith.subf %28, %29 : vector<8x1xf32>
    %cst_12 = arith.constant -1.000000e+30 : f32
    %31 = vector.broadcast %cst_12 : f32 to vector<8x128xf32>
    %32 = arith.select %13, %10, %31 : vector<8x128xi1>, vector<8x128xf32>
    %cst_13 = arith.constant dense<0xFF800000> : vector<8xf32>
    %33 = vector.multi_reduction <maximumf>, %32, %cst_13 [1] : vector<8x128xf32> to vector<8xf32>
    %34 = vector.shape_cast %33 : vector<8xf32> to vector<8x1xf32>
    %35 = vector.broadcast %34 : vector<8x1xf32> to vector<8x128xf32>
    %36 = arith.subf %32, %35 : vector<8x128xf32>
    %37 = math.exp %36 : vector<8x128xf32>
    %cst_14 = arith.constant dense<0.000000e+00> : vector<8xf32>
    %38 = vector.multi_reduction <add>, %37, %cst_14 [1] : vector<8x128xf32> to vector<8xf32>
    %39 = vector.shape_cast %38 : vector<8xf32> to vector<8x1xf32>
    %40 = vector.broadcast %17 : vector<8x1xf32> to vector<8x128xf32>
    %41 = arith.cmpf oge, %15, %40 : vector<8x128xf32>
    %c128_i32 = arith.constant 128 : i32
    %42 = vector.broadcast %c128_i32 : i32 to vector<8x128xi32>
    %43 = arith.select %41, %11, %42 : vector<8x128xi1>, vector<8x128xi32>
    %cst_15 = arith.constant dense<2147483647> : vector<8xi32>
    %44 = vector.multi_reduction <minsi>, %43, %cst_15 [1] : vector<8x128xi32> to vector<8xi32>
    %45 = vector.shape_cast %44 : vector<8xi32> to vector<8x1xi32>
    %46 = vector.broadcast %45 : vector<8x1xi32> to vector<8x128xi32>
    %47 = arith.cmpi eq, %11, %46 : vector<8x128xi32>
    %cst_16 = arith.constant 0.000000e+00 : f32
    %48 = vector.broadcast %cst_16 : f32 to vector<8x128xf32>
    %49 = arith.select %47, %37, %48 : vector<8x128xi1>, vector<8x128xf32>
    %cst_17 = arith.constant dense<0.000000e+00> : vector<8xf32>
    %50 = vector.multi_reduction <add>, %49, %cst_17 [1] : vector<8x128xf32> to vector<8xf32>
    %51 = vector.shape_cast %50 : vector<8xf32> to vector<8x1xf32>
    %52 = arith.divf %51, %39 : vector<8x1xf32>
    %53 = arith.subf %27, %52 : vector<8x1xf32>
    %cst_18 = arith.constant 3.45387769 : f32
    %54 = vector.broadcast %cst_18 : f32 to vector<8x1xf32>
    %55 = arith.cmpf olt, %30, %54 : vector<8x1xf32>
    %56 = arith.extui %55 : vector<8x1xi1> to vector<8x1xi32>
    %57 = arith.sitofp %56 : vector<8x1xi32> to vector<8x1xf32>
    %cst_19 = arith.constant 3.000000e-01 : f32
    %58 = vector.broadcast %cst_19 : f32 to vector<8x1xf32>
    %59 = arith.cmpf ogt, %53, %58 : vector<8x1xf32>
    %60 = arith.extui %59 : vector<8x1xi1> to vector<8x1xi32>
    %61 = arith.sitofp %60 : vector<8x1xi32> to vector<8x1xf32>
    %62 = arith.mulf %57, %61 : vector<8x1xf32>
    %cst_20 = arith.constant 2.76310205 : f32
    %63 = vector.broadcast %cst_20 : f32 to vector<8x1xf32>
    %64 = arith.subf %63, %30 : vector<8x1xf32>
    %65 = math.exp %64 : vector<8x1xf32>
    %66 = math.exp %53 : vector<8x1xf32>
    %67 = arith.addf %65, %66 : vector<8x1xf32>
    %68 = vector.shape_cast %57 : vector<8x1xf32> to vector<1x8x1xf32>
    %cst_21 = arith.constant dense<0.000000e+00> : vector<1xf32>
    %69 = vector.multi_reduction <add>, %68, %cst_21 [1, 2] : vector<1x8x1xf32> to vector<1xf32>
    %70 = vector.shape_cast %69 : vector<1xf32> to vector<1x1x1xf32>
    %71 = vector.extract %70[0, 0, 0] : f32 from vector<1x1x1xf32>
    %72 = vector.shape_cast %62 : vector<8x1xf32> to vector<1x8x1xf32>
    %cst_22 = arith.constant dense<0.000000e+00> : vector<1xf32>
    %73 = vector.multi_reduction <add>, %72, %cst_22 [1, 2] : vector<1x8x1xf32> to vector<1xf32>
    %74 = vector.shape_cast %73 : vector<1xf32> to vector<1x1x1xf32>
    %75 = vector.extract %74[0, 0, 0] : f32 from vector<1x1x1xf32>
    %76 = arith.mulf %30, %67 : vector<8x1xf32>
    %77 = arith.mulf %76, %62 : vector<8x1xf32>
    %78 = vector.shape_cast %77 : vector<8x1xf32> to vector<1x8x1xf32>
    %cst_23 = arith.constant dense<0.000000e+00> : vector<1xf32>
    %79 = vector.multi_reduction <add>, %78, %cst_23 [1, 2] : vector<1x8x1xf32> to vector<1xf32>
    %80 = vector.shape_cast %79 : vector<1xf32> to vector<1x1x1xf32>
    %81 = vector.extract %80[0, 0, 0] : f32 from vector<1x1x1xf32>
    %cst_24 = arith.constant 0.000000e+00 : f32
    %82 = arith.cmpf ogt, %75, %cst_24 : f32
    %cst_25 = arith.constant 1.000000e+00 : f32
    %83 = arith.maximumf %75, %cst_25 : f32
    %84 = arith.divf %81, %83 : f32
    %cst_26 = arith.constant 0.000000e+00 : f32
    %85 = arith.select %82, %84, %cst_26 : f32
    %c0_i32 = arith.constant 0 : i32
    %86 = vector.broadcast %c0_i32 : i32 to vector<8x128xi32>
    %87 = arith.cmpi eq, %11, %86 : vector<8x128xi32>
    %cst_27 = arith.constant 0.000000e+00 : f32
    %88 = vector.shape_cast %30 : vector<8x1xf32> to vector<8x1xf32>
    %89 = vector.broadcast %88 : vector<8x1xf32> to vector<8x128xf32>
    %90 = vector.broadcast %cst_27 : f32 to vector<8x128xf32>
    %91 = arith.select %87, %89, %90 : vector<8x128xi1>, vector<8x128xf32>
    %c1_i32 = arith.constant 1 : i32
    %92 = vector.broadcast %c1_i32 : i32 to vector<8x128xi32>
    %93 = arith.cmpi eq, %11, %92 : vector<8x128xi32>
    %94 = vector.shape_cast %53 : vector<8x1xf32> to vector<8x1xf32>
    %95 = vector.broadcast %94 : vector<8x1xf32> to vector<8x128xf32>
    %96 = arith.select %93, %95, %91 : vector<8x128xi1>, vector<8x128xf32>
    %c2_i32 = arith.constant 2 : i32
    %97 = vector.broadcast %c2_i32 : i32 to vector<8x128xi32>
    %98 = arith.cmpi eq, %11, %97 : vector<8x128xi32>
    %99 = vector.broadcast %85 : f32 to vector<8x128xf32>
    %100 = arith.select %98, %99, %96 : vector<8x128xi1>, vector<8x128xf32>
    %c3_i32 = arith.constant 3 : i32
    %101 = vector.broadcast %c3_i32 : i32 to vector<8x128xi32>
    %102 = arith.cmpi eq, %11, %101 : vector<8x128xi32>
    %103 = vector.broadcast %71 : f32 to vector<8x128xf32>
    %104 = arith.select %102, %103, %100 : vector<8x128xi1>, vector<8x128xf32>
    %c4_i32 = arith.constant 4 : i32
    %105 = vector.broadcast %c4_i32 : i32 to vector<8x128xi32>
    %106 = arith.cmpi eq, %11, %105 : vector<8x128xi32>
    %107 = vector.broadcast %75 : f32 to vector<8x128xf32>
    %108 = arith.select %106, %107, %104 : vector<8x128xi1>, vector<8x128xf32>
    %c0_28 = arith.constant 0 : index
    %c0_29 = arith.constant 0 : index
    %109 = vector.load %arg4[%c0_28, %c0_29] : memref<16x128xf32, #tpu.memory_space<vmem>>, vector<8x128xf32>
    tpu.vector_store %arg4[%c0_28, %c0_29], %9 {strides = array<i32>} : memref<16x128xf32, #tpu.memory_space<vmem>>, vector<8x128xf32>,
    %c8 = arith.constant 8 : index
    %c0_30 = arith.constant 0 : index
    %110 = vector.load %arg4[%c8, %c0_30] : memref<16x128xf32, #tpu.memory_space<vmem>>, vector<8x128xf32>
    tpu.vector_store %arg4[%c8, %c0_30], %108 {strides = array<i32>} : memref<16x128xf32, #tpu.memory_space<vmem>>, vector<8x128xf32>,
    return
  }
}

</mosaic_0001>

<llo_original>
// kernel: ptta_forward.1
$region0: #{ptta_forward.1}
  #allocation0 [shape = 'u32[]', space=smem, size = 0x4, offset = 0x4, fixed_abs, tag = 'smem constant byte address 0x4 - core index']
  #allocation1 [shape = 'u32[144,128]{1,0:T(1,128)}', space=vmem, size = 0x12000, scoped, tag = 'internal scratch']
  %s0 = inlined_call_operand.vmem [shape: f32[8,1024], index: 0, kind: input, shape index: {}]
  %s1 = inlined_call_operand.vmem [shape: f32[8,1024], index: 1, kind: input, shape index: {}]
  %s2 = inlined_call_operand.vmem [shape: bf16[1024,128], index: 2, kind: input, shape index: {}]
  %s3 = inlined_call_operand.vmem [shape: f32[1,128], index: 3, kind: input, shape index: {}]
  %s4 = inlined_call_operand.vmem [shape: f32[16,128], index: 4, kind: output, shape index: {}]
  %s5 = sld [smem:[#allocation0]]
  $region26: #{ptta_forward.1} parent=0
    _
  %s7 = ssub.s32 1, %s5
  %s8 = scalar_select 0, %s7, %s5
  // Predicated region
  $region2: #{ptta_forward.1} parent=0 // pred_check
    _
  $region3: #{ptta_forward.1} parent=0 // pred_check_branch
    %10 = sbr.rel (0) target = $region5
  $region4: #{ptta_forward.1} parent=0 // pred_region
    _
  $region5: #{ptta_forward.1} parent=0 // pred_fallthru
    _
  // Predicated region
  $region6: #{ptta_forward.1} parent=0 // pred_check
    _
  $region7: #{ptta_forward.1} parent=0 // pred_check_branch
    %12 = sbr.rel (0) target = $region9
  $region8: #{ptta_forward.1} parent=0 // pred_region
    _
  $region9: #{ptta_forward.1} parent=0 // pred_fallthru
    _
  // Predicated region
  $region10: #{ptta_forward.1} parent=0 // pred_check
    _
  $region11: #{ptta_forward.1} parent=0 // pred_check_branch
    %14 = sbr.rel (0) target = $region13
  $region12: #{ptta_forward.1} parent=0 // pred_region
    _
  $region13: #{ptta_forward.1} parent=0 // pred_fallthru
    _
  // Predicated region
  $region14: #{ptta_forward.1} parent=0 // pred_check
    _
  $region15: #{ptta_forward.1} parent=0 // pred_check_branch
    %16 = sbr.rel (0) target = $region17
  $region16: #{ptta_forward.1} parent=0 // pred_region
    _
  $region17: #{ptta_forward.1} parent=0 // pred_fallthru
    _
  %v18 = vld [vmem:[%s0] sm:$0xff]
  %v19 = vld [vmem:[%s0 + $0x8] sm:$0xff]
  %v20 = vld [vmem:[%s0 + $0x10] sm:$0xff]
  %v21 = vld [vmem:[%s0 + $0x18] sm:$0xff]
  %v22 = vld [vmem:[%s0 + $0x20] sm:$0xff]
  %v23 = vld [vmem:[%s0 + $0x28] sm:$0xff]
  %v24 = vld [vmem:[%s0 + $0x30] sm:$0xff]
  %v25 = vld [vmem:[%s0 + $0x38] sm:$0xff]
  %v26 = vld [vmem:[%s1] sm:$0xff]
  %v27 = vld [vmem:[%s1 + $0x8] sm:$0xff]
  %v28 = vld [vmem:[%s1 + $0x10] sm:$0xff]
  %v29 = vld [vmem:[%s1 + $0x18] sm:$0xff]
  %v30 = vld [vmem:[%s1 + $0x20] sm:$0xff]
  %v31 = vld [vmem:[%s1 + $0x28] sm:$0xff]
  %v32 = vld [vmem:[%s1 + $0x30] sm:$0xff]
  %v33 = vld [vmem:[%s1 + $0x38] sm:$0xff]
  %v34 = vpack.c.bf16 %v26, %v18
  %v35 = vpack.c.bf16 %v27, %v19
  %v36 = vpack.c.bf16 %v28, %v20
  %v37 = vpack.c.bf16 %v29, %v21
  %v38 = vpack.c.bf16 %v30, %v22
  %v39 = vpack.c.bf16 %v31, %v23
  %v40 = vpack.c.bf16 %v32, %v24
  %v41 = vpack.c.bf16 %v33, %v25
  %v42 = vld [vmem:[%s2] sm:$0xf]
  %v43 = vld [vmem:[%s2 + $0x4] sm:$0xf]
  %v44 = vld [vmem:[%s2 + $0x8] sm:$0xf]
  %v45 = vld [vmem:[%s2 + $0xc] sm:$0xf]
  %v46 = vld [vmem:[%s2 + $0x10] sm:$0xf]
  %v47 = vld [vmem:[%s2 + $0x14] sm:$0xf]
  %v48 = vld [vmem:[%s2 + $0x18] sm:$0xf]
  %v49 = vld [vmem:[%s2 + $0x1c] sm:$0xf]
  %v50 = vld [vmem:[%s2 + $0x20] sm:$0xf]
  %v51 = vld [vmem:[%s2 + $0x24] sm:$0xf]
  %v52 = vld [vmem:[%s2 + $0x28] sm:$0xf]
  %v53 = vld [vmem:[%s2 + $0x2c] sm:$0xf]
  %v54 = vld [vmem:[%s2 + $0x30] sm:$0xf]
  %v55 = vld [vmem:[%s2 + $0x34] sm:$0xf]
  %v56 = vld [vmem:[%s2 + $0x38] sm:$0xf]
  %v57 = vld [vmem:[%s2 + $0x3c] sm:$0xf]
  %v58 = vld [vmem:[%s2 + $0x40] sm:$0xf]
  %v59 = vld [vmem:[%s2 + $0x44] sm:$0xf]
  %v60 = vld [vmem:[%s2 + $0x48] sm:$0xf]
  %v61 = vld [vmem:[%s2 + $0x4c] sm:$0xf]
  %v62 = vld [vmem:[%s2 + $0x50] sm:$0xf]
  %v63 = vld [vmem:[%s2 + $0x54] sm:$0xf]
  %v64 = vld [vmem:[%s2 + $0x58] sm:$0xf]
  %v65 = vld [vmem:[%s2 + $0x5c] sm:$0xf]
  %v66 = vld [vmem:[%s2 + $0x60] sm:$0xf]
  %v67 = vld [vmem:[%s2 + $0x64] sm:$0xf]
  %v68 = vld [vmem:[%s2 + $0x68] sm:$0xf]
  %v69 = vld [vmem:[%s2 + $0x6c] sm:$0xf]
  %v70 = vld [vmem:[%s2 + $0x70] sm:$0xf]
  %v71 = vld [vmem:[%s2 + $0x74] sm:$0xf]
  %v72 = vld [vmem:[%s2 + $0x78] sm:$0xf]
  %v73 = vld [vmem:[%s2 + $0x7c] sm:$0xf]
  %v74 = vld [vmem:[%s2 + $0x80] sm:$0xf]
  %v75 = vld [vmem:[%s2 + $0x84] sm:$0xf]
  %v76 = vld [vmem:[%s2 + $0x88] sm:$0xf]
  %v77 = vld [vmem:[%s2 + $0x8c] sm:$0xf]
  %v78 = vld [vmem:[%s2 + $0x90] sm:$0xf]
  %v79 = vld [vmem:[%s2 + $0x94] sm:$0xf]
  %v80 = vld [vmem:[%s2 + $0x98] sm:$0xf]
  %v81 = vld [vmem:[%s2 + $0x9c] sm:$0xf]
  %v82 = vld [vmem:[%s2 + $0xa0] sm:$0xf]
  %v83 = vld [vmem:[%s2 + $0xa4] sm:$0xf]
  %v84 = vld [vmem:[%s2 + $0xa8] sm:$0xf]
  %v85 = vld [vmem:[%s2 + $0xac] sm:$0xf]
  %v86 = vld [vmem:[%s2 + $0xb0] sm:$0xf]
  %v87 = vld [vmem:[%s2 + $0xb4] sm:$0xf]
  %v88 = vld [vmem:[%s2 + $0xb8] sm:$0xf]
  %v89 = vld [vmem:[%s2 + $0xbc] sm:$0xf]
  %v90 = vld [vmem:[%s2 + $0xc0] sm:$0xf]
  %v91 = vld [vmem:[%s2 + $0xc4] sm:$0xf]
  %v92 = vld [vmem:[%s2 + $0xc8] sm:$0xf]
  %v93 = vld [vmem:[%s2 + $0xcc] sm:$0xf]
  %v94 = vld [vmem:[%s2 + $0xd0] sm:$0xf]
  %v95 = vld [vmem:[%s2 + $0xd4] sm:$0xf]
  %v96 = vld [vmem:[%s2 + $0xd8] sm:$0xf]
  %v97 = vld [vmem:[%s2 + $0xdc] sm:$0xf]
  %v98 = vld [vmem:[%s2 + $0xe0] sm:$0xf]
  %v99 = vld [vmem:[%s2 + $0xe4] sm:$0xf]
  %v100 = vld [vmem:[%s2 + $0xe8] sm:$0xf]
  %v101 = vld [vmem:[%s2 + $0xec] sm:$0xf]
  %v102 = vld [vmem:[%s2 + $0xf0] sm:$0xf]
  %v103 = vld [vmem:[%s2 + $0xf4] sm:$0xf]
  %v104 = vld [vmem:[%s2 + $0xf8] sm:$0xf]
  %v105 = vld [vmem:[%s2 + $0xfc] sm:$0xf]
  %v106 = vld [vmem:[%s2 + $0x100] sm:$0xf]
  %v107 = vld [vmem:[%s2 + $0x104] sm:$0xf]
  %v108 = vld [vmem:[%s2 + $0x108] sm:$0xf]
  %v109 = vld [vmem:[%s2 + $0x10c] sm:$0xf]
  %v110 = vld [vmem:[%s2 + $0x110] sm:$0xf]
  %v111 = vld [vmem:[%s2 + $0x114] sm:$0xf]
  %v112 = vld [vmem:[%s2 + $0x118] sm:$0xf]
  %v113 = vld [vmem:[%s2 + $0x11c] sm:$0xf]
  %v114 = vld [vmem:[%s2 + $0x120] sm:$0xf]
  %v115 = vld [vmem:[%s2 + $0x124] sm:$0xf]
  %v116 = vld [vmem:[%s2 + $0x128] sm:$0xf]
  %v117 = vld [vmem:[%s2 + $0x12c] sm:$0xf]
  %v118 = vld [vmem:[%s2 + $0x130] sm:$0xf]
  %v119 = vld [vmem:[%s2 + $0x134] sm:$0xf]
  %v120 = vld [vmem:[%s2 + $0x138] sm:$0xf]
  %v121 = vld [vmem:[%s2 + $0x13c] sm:$0xf]
  %v122 = vld [vmem:[%s2 + $0x140] sm:$0xf]
  %v123 = vld [vmem:[%s2 + $0x144] sm:$0xf]
  %v124 = vld [vmem:[%s2 + $0x148] sm:$0xf]
  %v125 = vld [vmem:[%s2 + $0x14c] sm:$0xf]
  %v126 = vld [vmem:[%s2 + $0x150] sm:$0xf]
  %v127 = vld [vmem:[%s2 + $0x154] sm:$0xf]
  %v128 = vld [vmem:[%s2 + $0x158] sm:$0xf]
  %v129 = vld [vmem:[%s2 + $0x15c] sm:$0xf]
  %v130 = vld [vmem:[%s2 + $0x160] sm:$0xf]
  %v131 = vld [vmem:[%s2 + $0x164] sm:$0xf]
  %v132 = vld [vmem:[%s2 + $0x168] sm:$0xf]
  %v133 = vld [vmem:[%s2 + $0x16c] sm:$0xf]
  %v134 = vld [vmem:[%s2 + $0x170] sm:$0xf]
  %v135 = vld [vmem:[%s2 + $0x174] sm:$0xf]
  %v136 = vld [vmem:[%s2 + $0x178] sm:$0xf]
  %v137 = vld [vmem:[%s2 + $0x17c] sm:$0xf]
  %v138 = vld [vmem:[%s2 + $0x180] sm:$0xf]
  %v139 = vld [vmem:[%s2 + $0x184] sm:$0xf]
  %v140 = vld [vmem:[%s2 + $0x188] sm:$0xf]
  %v141 = vld [vmem:[%s2 + $0x18c] sm:$0xf]
  %v142 = vld [vmem:[%s2 + $0x190] sm:$0xf]
  %v143 = vld [vmem:[%s2 + $0x194] sm:$0xf]
  %v144 = vld [vmem:[%s2 + $0x198] sm:$0xf]
  %v145 = vld [vmem:[%s2 + $0x19c] sm:$0xf]
  %v146 = vld [vmem:[%s2 + $0x1a0] sm:$0xf]
  %v147 = vld [vmem:[%s2 + $0x1a4] sm:$0xf]
  %v148 = vld [vmem:[%s2 + $0x1a8] sm:$0xf]
  %v149 = vld [vmem:[%s2 + $0x1ac] sm:$0xf]
  %v150 = vld [vmem:[%s2 + $0x1b0] sm:$0xf]
  %v151 = vld [vmem:[%s2 + $0x1b4] sm:$0xf]
  %v152 = vld [vmem:[%s2 + $0x1b8] sm:$0xf]
  %v153 = vld [vmem:[%s2 + $0x1bc] sm:$0xf]
  %v154 = vld [vmem:[%s2 + $0x1c0] sm:$0xf]
  %v155 = vld [vmem:[%s2 + $0x1c4] sm:$0xf]
  %v156 = vld [vmem:[%s2 + $0x1c8] sm:$0xf]
  %v157 = vld [vmem:[%s2 + $0x1cc] sm:$0xf]
  %v158 = vld [vmem:[%s2 + $0x1d0] sm:$0xf]
  %v159 = vld [vmem:[%s2 + $0x1d4] sm:$0xf]
  %v160 = vld [vmem:[%s2 + $0x1d8] sm:$0xf]
  %v161 = vld [vmem:[%s2 + $0x1dc] sm:$0xf]
  %v162 = vld [vmem:[%s2 + $0x1e0] sm:$0xf]
  %v163 = vld [vmem:[%s2 + $0x1e4] sm:$0xf]
  %v164 = vld [vmem:[%s2 + $0x1e8] sm:$0xf]
  %v165 = vld [vmem:[%s2 + $0x1ec] sm:$0xf]
  %v166 = vld [vmem:[%s2 + $0x1f0] sm:$0xf]
  %v167 = vld [vmem:[%s2 + $0x1f4] sm:$0xf]
  %v168 = vld [vmem:[%s2 + $0x1f8] sm:$0xf]
  %v169 = vld [vmem:[%s2 + $0x1fc] sm:$0xf]
  %v170 = vld [vmem:[%s3] sm:$0x1]
  %v172 = vlaneseq
  %v173 = vshrl.u32 %v172, 7
  %v174 = vsub.s32 0, %v173
  %v175 = vrot.slane %v170, %v174
  %v305 = vunpack.c.l.b16 %v42
  %v306 = vunpack.c.l.b16 %v43
  %v307 = vunpack.c.l.b16 %v44
  %v308 = vunpack.c.l.b16 %v45
  %v309 = vunpack.c.l.b16 %v46
  %v310 = vunpack.c.l.b16 %v47
  %v311 = vunpack.c.l.b16 %v48
  %v312 = vunpack.c.l.b16 %v49
  %v313 = vunpack.c.l.b16 %v50
  %v314 = vunpack.c.l.b16 %v51
  %v315 = vunpack.c.l.b16 %v52
  %v316 = vunpack.c.l.b16 %v53
  %v317 = vunpack.c.l.b16 %v54
  %v318 = vunpack.c.l.b16 %v55
  %v319 = vunpack.c.l.b16 %v56
  %v320 = vunpack.c.l.b16 %v57
  %v321 = vunpack.c.l.b16 %v58
  %v322 = vunpack.c.l.b16 %v59
  %v323 = vunpack.c.l.b16 %v60
  %v324 = vunpack.c.l.b16 %v61
  %v325 = vunpack.c.l.b16 %v62
  %v326 = vunpack.c.l.b16 %v63
  %v327 = vunpack.c.l.b16 %v64
  %v328 = vunpack.c.l.b16 %v65
  %v329 = vunpack.c.l.b16 %v66
  %v330 = vunpack.c.l.b16 %v67
  %v331 = vunpack.c.l.b16 %v68
  %v332 = vunpack.c.l.b16 %v69
  %v333 = vunpack.c.l.b16 %v70
  %v334 = vunpack.c.l.b16 %v71
  %v335 = vunpack.c.l.b16 %v72
  %v336 = vunpack.c.l.b16 %v73
  %v337 = vunpack.c.l.b16 %v74
  %v338 = vunpack.c.l.b16 %v75
  %v339 = vunpack.c.l.b16 %v76
  %v340 = vunpack.c.l.b16 %v77
  %v341 = vunpack.c.l.b16 %v78
  %v342 = vunpack.c.l.b16 %v79
  %v343 = vunpack.c.l.b16 %v80
  %v344 = vunpack.c.l.b16 %v81
  %v345 = vunpack.c.l.b16 %v82
  %v346 = vunpack.c.l.b16 %v83
  %v347 = vunpack.c.l.b16 %v84
  %v348 = vunpack.c.l.b16 %v85
  %v349 = vunpack.c.l.b16 %v86
  %v350 = vunpack.c.l.b16 %v87
  %v351 = vunpack.c.l.b16 %v88
  %v352 = vunpack.c.l.b16 %v89
  %v353 = vunpack.c.l.b16 %v90
  %v354 = vunpack.c.l.b16 %v91
  %v355 = vunpack.c.l.b16 %v92
  %v356 = vunpack.c.l.b16 %v93
  %v357 = vunpack.c.l.b16 %v94
  %v358 = vunpack.c.l.b16 %v95
  %v359 = vunpack.c.l.b16 %v96
  %v360 = vunpack.c.l.b16 %v97
  %v361 = vunpack.c.l.b16 %v98
  %v362 = vunpack.c.l.b16 %v99
  %v363 = vunpack.c.l.b16 %v100
  %v364 = vunpack.c.l.b16 %v101
  %v365 = vunpack.c.l.b16 %v102
  %v366 = vunpack.c.l.b16 %v103
  %v367 = vunpack.c.l.b16 %v104
  %v368 = vunpack.c.l.b16 %v105
  %v369 = vunpack.c.l.b16 %v106
  %v370 = vunpack.c.l.b16 %v107
  %v371 = vunpack.c.l.b16 %v108
  %v372 = vunpack.c.l.b16 %v109
  %v373 = vunpack.c.l.b16 %v110
  %v374 = vunpack.c.l.b16 %v111
  %v375 = vunpack.c.l.b16 %v112
  %v376 = vunpack.c.l.b16 %v113
  %v377 = vunpack.c.l.b16 %v114
  %v378 = vunpack.c.l.b16 %v115
  %v379 = vunpack.c.l.b16 %v116
  %v380 = vunpack.c.l.b16 %v117
  %v381 = vunpack.c.l.b16 %v118
  %v382 = vunpack.c.l.b16 %v119
  %v383 = vunpack.c.l.b16 %v120
  %v384 = vunpack.c.l.b16 %v121
  %v385 = vunpack.c.l.b16 %v122
  %v386 = vunpack.c.l.b16 %v123
  %v387 = vunpack.c.l.b16 %v124
  %v388 = vunpack.c.l.b16 %v125
  %v389 = vunpack.c.l.b16 %v126
  %v390 = vunpack.c.l.b16 %v127
  %v391 = vunpack.c.l.b16 %v128
  %v392 = vunpack.c.l.b16 %v129
  %v393 = vunpack.c.l.b16 %v130
  %v394 = vunpack.c.l.b16 %v131
  %v395 = vunpack.c.l.b16 %v132
  %v396 = vunpack.c.l.b16 %v133
  %v397 = vunpack.c.l.b16 %v134
  %v398 = vunpack.c.l.b16 %v135
  %v399 = vunpack.c.l.b16 %v136
  %v400 = vunpack.c.l.b16 %v137
  %v401 = vunpack.c.l.b16 %v138
  %v402 = vunpack.c.l.b16 %v139
  %v403 = vunpack.c.l.b16 %v140
  %v404 = vunpack.c.l.b16 %v141
  %v405 = vunpack.c.l.b16 %v142
  %v406 = vunpack.c.l.b16 %v143
  %v407 = vunpack.c.l.b16 %v144
  %v408 = vunpack.c.l.b16 %v145
  %v409 = vunpack.c.l.b16 %v146
  %v410 = vunpack.c.l.b16 %v147
  %v411 = vunpack.c.l.b16 %v148
  %v412 = vunpack.c.l.b16 %v149
  %v413 = vunpack.c.l.b16 %v150
  %v414 = vunpack.c.l.b16 %v151
  %v415 = vunpack.c.l.b16 %v152
  %v416 = vunpack.c.l.b16 %v153
  %v417 = vunpack.c.l.b16 %v154
  %v418 = vunpack.c.l.b16 %v155
  %v419 = vunpack.c.l.b16 %v156
  %v420 = vunpack.c.l.b16 %v157
  %v421 = vunpack.c.l.b16 %v158
  %v422 = vunpack.c.l.b16 %v159
  %v423 = vunpack.c.l.b16 %v160
  %v424 = vunpack.c.l.b16 %v161
  %v425 = vunpack.c.l.b16 %v162
  %v426 = vunpack.c.l.b16 %v163
  %v427 = vunpack.c.l.b16 %v164
  %v428 = vunpack.c.l.b16 %v165
  %v429 = vunpack.c.l.b16 %v166
  %v430 = vunpack.c.l.b16 %v167
  %v431 = vunpack.c.l.b16 %v168
  %v432 = vunpack.c.l.b16 %v169
  %v433 = vpack.c.b16 %v306, %v305
  %v434 = vpack.c.b16 %v308, %v307
  %v435 = vpack.c.b16 %v310, %v309
  %v436 = vpack.c.b16 %v312, %v311
  %v437 = vpack.c.b16 %v314, %v313
  %v438 = vpack.c.b16 %v316, %v315
  %v439 = vpack.c.b16 %v318, %v317
  %v440 = vpack.c.b16 %v320, %v319
  %v441 = vpack.c.b16 %v322, %v321
  %v442 = vpack.c.b16 %v324, %v323
  %v443 = vpack.c.b16 %v326, %v325
  %v444 = vpack.c.b16 %v328, %v327
  %v445 = vpack.c.b16 %v330, %v329
  %v446 = vpack.c.b16 %v332, %v331
  %v447 = vpack.c.b16 %v334, %v333
  %v448 = vpack.c.b16 %v336, %v335
  %v449 = vpack.c.b16 %v338, %v337
  %v450 = vpack.c.b16 %v340, %v339
  %v451 = vpack.c.b16 %v342, %v341
  %v452 = vpack.c.b16 %v344, %v343
  %v453 = vpack.c.b16 %v346, %v345
  %v454 = vpack.c.b16 %v348, %v347
  %v455 = vpack.c.b16 %v350, %v349
  %v456 = vpack.c.b16 %v352, %v351
  %v457 = vpack.c.b16 %v354, %v353
  %v458 = vpack.c.b16 %v356, %v355
  %v459 = vpack.c.b16 %v358, %v357
  %v460 = vpack.c.b16 %v360, %v359
  %v461 = vpack.c.b16 %v362, %v361
  %v462 = vpack.c.b16 %v364, %v363
  %v463 = vpack.c.b16 %v366, %v365
  %v464 = vpack.c.b16 %v368, %v367
  %v465 = vpack.c.b16 %v370, %v369
  %v466 = vpack.c.b16 %v372, %v371
  %v467 = vpack.c.b16 %v374, %v373
  %v468 = vpack.c.b16 %v376, %v375
  %v469 = vpack.c.b16 %v378, %v377
  %v470 = vpack.c.b16 %v380, %v379
  %v471 = vpack.c.b16 %v382, %v381
  %v472 = vpack.c.b16 %v384, %v383
  %v473 = vpack.c.b16 %v386, %v385
  %v474 = vpack.c.b16 %v388, %v387
  %v475 = vpack.c.b16 %v390, %v389
  %v476 = vpack.c.b16 %v392, %v391
  %v477 = vpack.c.b16 %v394, %v393
  %v478 = vpack.c.b16 %v396, %v395
  %v479 = vpack.c.b16 %v398, %v397
  %v480 = vpack.c.b16 %v400, %v399
  %v481 = vpack.c.b16 %v402, %v401
  %v482 = vpack.c.b16 %v404, %v403
  %v483 = vpack.c.b16 %v406, %v405
  %v484 = vpack.c.b16 %v408, %v407
  %v485 = vpack.c.b16 %v410, %v409
  %v486 = vpack.c.b16 %v412, %v411
  %v487 = vpack.c.b16 %v414, %v413
  %v488 = vpack.c.b16 %v416, %v415
  %v489 = vpack.c.b16 %v418, %v417
  %v490 = vpack.c.b16 %v420, %v419
  %v491 = vpack.c.b16 %v422, %v421
  %v492 = vpack.c.b16 %v424, %v423
  %v493 = vpack.c.b16 %v426, %v425
  %v494 = vpack.c.b16 %v428, %v427
  %v495 = vpack.c.b16 %v430, %v429
  %v496 = vpack.c.b16 %v432, %v431
  %561 = vmatprep.subr.bf16.mxu0 0
  %562 = vmatpush1.bf16.msra.mxu0 %v433
  %563 = vmatprep.subr.bf16.mxu0 0
  %564 = vmatpush1.bf16.msra.mxu0 %v434
  %565 = vmatprep.subr.bf16.mxu0 0
  %566 = vmatpush1.bf16.msra.mxu0 %v435
  %567 = vmatprep.subr.bf16.mxu0 0
  %568 = vmatpush1.bf16.msra.mxu0 %v436
  %569 = vmatprep.subr.bf16.mxu0 0
  %570 = vmatpush1.bf16.msra.mxu0 %v437
  %571 = vmatprep.subr.bf16.mxu0 0
  %572 = vmatpush1.bf16.msra.mxu0 %v438
  %573 = vmatprep.subr.bf16.mxu0 0
  %574 = vmatpush1.bf16.msra.mxu0 %v439
  %575 = vmatprep.subr.bf16.mxu0 0
  %576 = vmatpush1.bf16.msra.mxu0 %v440
  %577 = vmatprep.subr.bf16.mxu0 0
  %578 = vmatpush1.bf16.msra.mxu0 %v441
  %579 = vmatprep.subr.bf16.mxu0 0
  %580 = vmatpush1.bf16.msra.mxu0 %v442
  %581 = vmatprep.subr.bf16.mxu0 0
  %582 = vmatpush1.bf16.msra.mxu0 %v443
  %583 = vmatprep.subr.bf16.mxu0 0
  %584 = vmatpush1.bf16.msra.mxu0 %v444
  %585 = vmatprep.subr.bf16.mxu0 0
  %586 = vmatpush1.bf16.msra.mxu0 %v445
  %587 = vmatprep.subr.bf16.mxu0 0
  %588 = vmatpush1.bf16.msra.mxu0 %v446
  %589 = vmatprep.subr.bf16.mxu0 0
  %590 = vmatpush1.bf16.msra.mxu0 %v447
  %591 = vmatprep.subr.bf16.mxu0 0
  %592 = vmatpush1.bf16.msra.mxu0 %v448
  %593 = vmatprep.mubr.bf16.mxu0 %v35
  %594 = vmatmul.mubr.bf16.gmra.mrb[0].mxu0 %v34
  %v595 = vpop.f32.mrb[0].mxu0
  %v596 = vadd.f32 %v175, %v595
  %v597 = vpop.f32.mrb[0].mxu0
  %v598 = vpop.f32.mrb[0].mxu0
  %v599 = vadd.f32 %v175, %v598
  %v600 = vpop.f32.mrb[0].mxu0
  %601 = vdwg.mxu0
  %602 = vmatprep.subr.bf16.mxu0 0
  %603 = vmatpush1.bf16.msra.mxu0 %v449
  %604 = vmatprep.subr.bf16.mxu0 0
  %605 = vmatpush1.bf16.msra.mxu0 %v450
  %606 = vmatprep.subr.bf16.mxu0 0
  %607 = vmatpush1.bf16.msra.mxu0 %v451
  %608 = vmatprep.subr.bf16.mxu0 0
  %609 = vmatpush1.bf16.msra.mxu0 %v452
  %610 = vmatprep.subr.bf16.mxu0 0
  %611 = vmatpush1.bf16.msra.mxu0 %v453
  %612 = vmatprep.subr.bf16.mxu0 0
  %613 = vmatpush1.bf16.msra.mxu0 %v454
  %614 = vmatprep.subr.bf16.mxu0 0
  %615 = vmatpush1.bf16.msra.mxu0 %v455
  %616 = vmatprep.subr.bf16.mxu0 0
  %617 = vmatpush1.bf16.msra.mxu0 %v456
  %618 = vmatprep.subr.bf16.mxu0 0
  %619 = vmatpush1.bf16.msra.mxu0 %v457
  %620 = vmatprep.subr.bf16.mxu0 0
  %621 = vmatpush1.bf16.msra.mxu0 %v458
  %622 = vmatprep.subr.bf16.mxu0 0
  %623 = vmatpush1.bf16.msra.mxu0 %v459
  %624 = vmatprep.subr.bf16.mxu0 0
  %625 = vmatpush1.bf16.msra.mxu0 %v460
  %626 = vmatprep.subr.bf16.mxu0 0
  %627 = vmatpush1.bf16.msra.mxu0 %v461
  %628 = vmatprep.subr.bf16.mxu0 0
  %629 = vmatpush1.bf16.msra.mxu0 %v462
  %630 = vmatprep.subr.bf16.mxu0 0
  %631 = vmatpush1.bf16.msra.mxu0 %v463
  %632 = vmatprep.subr.bf16.mxu0 0
  %633 = vmatpush1.bf16.msra.mxu0 %v464
  %634 = vmatprep.mubr.bf16.mxu0 %v37
  %635 = vmatmul.mubr.bf16.gmra.mrb[0].mxu0 %v36
  %v636 = vpop.f32.mrb[0].mxu0
  %v637 = vadd.f32 %v596, %v636
  %v638 = vpop.f32.mrb[0].mxu0
  %v639 = vpop.f32.mrb[0].mxu0
  %v640 = vadd.f32 %v599, %v639
  %v641 = vpop.f32.mrb[0].mxu0
  %642 = vdwg.mxu0
  %643 = vmatprep.subr.bf16.mxu0 0
  %644 = vmatpush1.bf16.msra.mxu0 %v465
  %645 = vmatprep.subr.bf16.mxu0 0
  %646 = vmatpush1.bf16.msra.mxu0 %v466
  %647 = vmatprep.subr.bf16.mxu0 0
  %648 = vmatpush1.bf16.msra.mxu0 %v467
  %649 = vmatprep.subr.bf16.mxu0 0
  %650 = vmatpush1.bf16.msra.mxu0 %v468
  %651 = vmatprep.subr.bf16.mxu0 0
  %652 = vmatpush1.bf16.msra.mxu0 %v469
  %653 = vmatprep.subr.bf16.mxu0 0
  %654 = vmatpush1.bf16.msra.mxu0 %v470
  %655 = vmatprep.subr.bf16.mxu0 0
  %656 = vmatpush1.bf16.msra.mxu0 %v471
  %657 = vmatprep.subr.bf16.mxu0 0
  %658 = vmatpush1.bf16.msra.mxu0 %v472
  %659 = vmatprep.subr.bf16.mxu0 0
  %660 = vmatpush1.bf16.msra.mxu0 %v473
  %661 = vmatprep.subr.bf16.mxu0 0
  %662 = vmatpush1.bf16.msra.mxu0 %v474
  %663 = vmatprep.subr.bf16.mxu0 0
  %664 = vmatpush1.bf16.msra.mxu0 %v475
  %665 = vmatprep.subr.bf16.mxu0 0
  %666 = vmatpush1.bf16.msra.mxu0 %v476
  %667 = vmatprep.subr.bf16.mxu0 0
  %668 = vmatpush1.bf16.msra.mxu0 %v477
  %669 = vmatprep.subr.bf16.mxu0 0
  %670 = vmatpush1.bf16.msra.mxu0 %v478
  %671 = vmatprep.subr.bf16.mxu0 0
  %672 = vmatpush1.bf16.msra.mxu0 %v479
  %673 = vmatprep.subr.bf16.mxu0 0
  %674 = vmatpush1.bf16.msra.mxu0 %v480
  %675 = vmatprep.mubr.bf16.mxu0 %v39
  %676 = vmatmul.mubr.bf16.gmra.mrb[0].mxu0 %v38
  %v677 = vpop.f32.mrb[0].mxu0
  %v678 = vadd.f32 %v637, %v677
  %v679 = vpop.f32.mrb[0].mxu0
  %v680 = vpop.f32.mrb[0].mxu0
  %v681 = vadd.f32 %v640, %v680
  %v682 = vpop.f32.mrb[0].mxu0
  %683 = vdwg.mxu0
  %684 = vmatprep.subr.bf16.mxu0 0
  %685 = vmatpush1.bf16.msra.mxu0 %v481
  %686 = vmatprep.subr.bf16.mxu0 0
  %687 = vmatpush1.bf16.msra.mxu0 %v482
  %688 = vmatprep.subr.bf16.mxu0 0
  %689 = vmatpush1.bf16.msra.mxu0 %v483
  %690 = vmatprep.subr.bf16.mxu0 0
  %691 = vmatpush1.bf16.msra.mxu0 %v484
  %692 = vmatprep.subr.bf16.mxu0 0
  %693 = vmatpush1.bf16.msra.mxu0 %v485
  %694 = vmatprep.subr.bf16.mxu0 0
  %695 = vmatpush1.bf16.msra.mxu0 %v486
  %696 = vmatprep.subr.bf16.mxu0 0
  %697 = vmatpush1.bf16.msra.mxu0 %v487
  %698 = vmatprep.subr.bf16.mxu0 0
  %699 = vmatpush1.bf16.msra.mxu0 %v488
  %700 = vmatprep.subr.bf16.mxu0 0
  %701 = vmatpush1.bf16.msra.mxu0 %v489
  %702 = vmatprep.subr.bf16.mxu0 0
  %703 = vmatpush1.bf16.msra.mxu0 %v490
  %704 = vmatprep.subr.bf16.mxu0 0
  %705 = vmatpush1.bf16.msra.mxu0 %v491
  %706 = vmatprep.subr.bf16.mxu0 0
  %707 = vmatpush1.bf16.msra.mxu0 %v492
  %708 = vmatprep.subr.bf16.mxu0 0
  %709 = vmatpush1.bf16.msra.mxu0 %v493
  %710 = vmatprep.subr.bf16.mxu0 0
  %711 = vmatpush1.bf16.msra.mxu0 %v494
  %712 = vmatprep.subr.bf16.mxu0 0
  %713 = vmatpush1.bf16.msra.mxu0 %v495
  %714 = vmatprep.subr.bf16.mxu0 0
  %715 = vmatpush1.bf16.msra.mxu0 %v496
  %716 = vmatprep.mubr.bf16.mxu0 %v41
  %717 = vmatmul.mubr.bf16.gmra.mrb[0].mxu0 %v40
  %v718 = vpop.f32.mrb[0].mxu0
  %v719 = vadd.f32 %v678, %v718
  %v720 = vpop.f32.mrb[0].mxu0
  %v721 = vpop.f32.mrb[0].mxu0
  %v722 = vadd.f32 %v681, %v721
  %v723 = vpop.f32.mrb[0].mxu0
  %724 = vdwg.mxu0
  %v725 = vlaneseq
  %v726 = vand.u32 %v725, 127
  %vm727 = vcmp.lt.s32.totalorder %v726, 16
  %v728 = vsel %vm727, %v719, -1e+30
  %729 = vmax.xlane.f32.xlu0 %v728
  %v730 = vpop.xlane.xlu0 %729
  %v731 = vsub.f32 %v728, %v730
  %v732 = vmul.f32 %v731, 1.442695
  %v733 = vpow.pop %v732
  %734 = vadd.xlane.f32.xlu0 %v733
  %v735 = vpop.xlane.xlu0 %734
  %v736 = vmul.f32 %v733, %v731
  %737 = vadd.xlane.f32.xlu0 %v736
  %v738 = vpop.xlane.xlu0 %737
  %v739 = vrcp.pop %v735
  %v740 = vmul.f32 1.0, %v739
  %v741 = vlog2.pop %v735
  %v742 = vmul.f32 %v741, 0.6931472
  %v743 = vmul.f32 %v738, %v740
  %v744 = vsub.f32 %v742, %v743
  %v745 = vsel %vm727, %v722, -1e+30
  %746 = vmax.xlane.f32.xlu0 %v745
  %v747 = vpop.xlane.xlu0 %746
  %v748 = vsub.f32 %v745, %v747
  %v749 = vmul.f32 %v748, 1.442695
  %v750 = vpow.pop %v749
  %751 = vadd.xlane.f32.xlu0 %v750
  %v752 = vpop.xlane.xlu0 %751
  %vm753 = vcmp.ge.f32.partialorder %v728, %v730
  %v754 = vsel %vm753, %v726, 128
  %v755 = vand.u32 %v754, 65535
  %v756 = vshra.s32 %v754, 16
  %v757 = vcvt.s32.f32 %v755
  %v758 = vcvt.s32.f32 %v756
  %759 = vmin.xlane.f32.xlu0 %v758
  %v760 = vpop.xlane.xlu0 %759
  %vm761 = vcmp.eq.f32.partialorder %v758, %v760
  %v762 = vsel %vm761, %v757, inf
  %763 = vmin.xlane.f32.xlu0 %v762
  %v764 = vpop.xlane.xlu0 %763
  %v765 = vcvt.f32.s32 %v764
  %v766 = vcvt.f32.s32 %v760
  %v767 = vshll.u32 %v766, 16
  %v768 = vadd.s32 %v767, %v765
  %vm769 = vcmp.eq.s32.totalorder %v726, %v768
  %v770 = vsel %vm769, %v750, 0.0
  %771 = vadd.xlane.f32.xlu0 %v770
  %v772 = vpop.xlane.xlu0 %771
  %v773 = vrcp.pop %v752
  %v774 = vmul.f32 %v772, %v773
  %v775 = vsub.f32 %v740, %v774
  %vm776 = vcmp.lt.f32.partialorder %v744, 3.4538777
  %v777 = vsel %vm776, 1, 0
  %v778 = vcvt.s32.f32 %v777
  %vm779 = vcmp.gt.f32.partialorder %v775, 0.3
  %v780 = vsel %vm779, 1, 0
  %v781 = vcvt.s32.f32 %v780
  %v782 = vmul.f32 %v778, %v781
  %v783 = vsub.f32 2.763102, %v744
  %v784 = vmul.f32 %v783, 1.442695
  %v785 = vpow.pop %v784
  %v786 = vmul.f32 %v775, 1.442695
  %v787 = vpow.pop %v786
  %v788 = vadd.f32 %v785, %v787
  %vm789 = vcmask 7168
  %v790 = vsel %vm789, %v778, 0.0
  %791 = vadd.xlane.f32.xlu0 %v790
  %v792 = vpop.xlane.xlu0 %791
  %v793 = vrot.slane %v792, 4
  %v794 = vadd.f32 %v792, %v793
  %v795 = vrot.slane %v794, 2
  %v796 = vadd.f32 %v794, %v795
  %v797 = vrot.slane %v796, 1
  %v798 = vadd.f32 %v796, %v797
  %s799 = vtos %v798
  %v800 = vsel %vm789, %v782, 0.0
  %801 = vadd.xlane.f32.xlu0 %v800
  %v802 = vpop.xlane.xlu0 %801
  %v803 = vrot.slane %v802, 4
  %v804 = vadd.f32 %v802, %v803
  %v805 = vrot.slane %v804, 2
  %v806 = vadd.f32 %v804, %v805
  %v807 = vrot.slane %v806, 1
  %v808 = vadd.f32 %v806, %v807
  %s809 = vtos %v808
  %v810 = vmul.f32 %v744, %v788
  %v811 = vmul.f32 %v810, %v782
  %v812 = vsel %vm789, %v811, 0.0
  %813 = vadd.xlane.f32.xlu0 %v812
  %v814 = vpop.xlane.xlu0 %813
  %v815 = vrot.slane %v814, 4
  %v816 = vadd.f32 %v814, %v815
  %v817 = vrot.slane %v816, 2
  %v818 = vadd.f32 %v816, %v817
  %v819 = vrot.slane %v818, 1
  %v820 = vadd.f32 %v818, %v819
  %s821 = vtos %v820
  %p822 = scmp.gt.f32.partialorder %s809, 0.0
  %s823 = smax.f32 %s809, 1.0
  %v824 = vstv %s823
  %v825 = vrcp.pop %v824
  %s826 = vtos %v825
  %s827 = smul.f32 %s821, %s826
  %s828 = scalar_select %p822, %s827, 0.0
  %vm829 = vcmp.eq.s32.totalorder %v726, 0
  %v830 = vsel %vm829, %v744, 0.0
  %vm831 = vcmp.eq.s32.totalorder %v726, 1
  %v832 = vsel %vm831, %v775, %v830
  %vm833 = vcmp.eq.s32.totalorder %v726, 2
  %v834 = vstv %s828
  %v835 = vsel %vm833, %v834, %v832
  %vm836 = vcmp.eq.s32.totalorder %v726, 3
  %v837 = vstv %s799
  %v838 = vsel %vm836, %v837, %v835
  %vm839 = vcmp.eq.s32.totalorder %v726, 4
  %v840 = vstv %s809
  %v841 = vsel %vm839, %v840, %v838
  %842 = vst [vmem:[%s4] sm:$0xff] %v719
  %843 = vst [vmem:[%s4 + $0x8] sm:$0xff] %v841
  // Predicated region
  $region18: #{ptta_forward.1} parent=0 // pred_check
    _
  $region19: #{ptta_forward.1} parent=0 // pred_check_branch
    %845 = sbr.rel (0) target = $region21
  $region20: #{ptta_forward.1} parent=0 // pred_region
    _
  $region21: #{ptta_forward.1} parent=0 // pred_fallthru
    _
  // Predicated region
  $region22: #{ptta_forward.1} parent=0 // pred_check
    _
  $region23: #{ptta_forward.1} parent=0 // pred_check_branch
    %847 = sbr.rel (0) target = $region25
  $region24: #{ptta_forward.1} parent=0 // pred_region
    _
  $region25: #{ptta_forward.1} parent=0 // pred_fallthru
    _

</llo_original>
